<compile_context>
chip_gen: v7x
topology: tpu7x:2x2x1
jax: 0.10.0
libtpu: 0.0.40
codegen_flags: <defaults>
</compile_context>

<pallas_src>
import functools

import numpy as np
import jax
import jax.numpy as jnp
from jax.experimental import pallas as pl
from jax.experimental.pallas import tpu as pltpu


HP = 128  # fused lane width for hidden / output slabs (mu block | log-var block)


def _round_up(x, m):
    return (x + m - 1) // m * m


# ---------------------------------------------------------------------------
# Pallas kernel: whole residual encoder for one tile of rows.
# ---------------------------------------------------------------------------

def _residual_encoder_kernel(xs_ref, wxs_ref, w1b_ref, web_ref, o_ref, *,
                             latent_dims):
    """Fused GatedConv2dResidualEncoder.forward for one row tile.

    xs_ref : (TM, D_pad)   bf16  rows = [x_s | 1 | 0...]  (ones col folds bias)
    wxs_ref: (D_pad, 3*HP) bf16  [W0_fused | W1a_fused | Wenc_a_fused]
    w1b_ref: (HP, HP)      bf16  block-diag(W1b_mu, W1b_logvar)
    web_ref: (HP, HP)      bf16  block-diag(Wenc_b_mu, Wenc_b_logvar)
    o_ref  : (TM, HP)      f32   cols [0:L] = mu, cols [L:2L] = std
    """
    xs = xs_ref[...]

    # One wide MXU pass for every x_s-side contribution (3 layers x 2 branches).
    xw = jnp.dot(xs, wxs_ref[...], preferred_element_type=jnp.float32)
    a0 = xw[:, 0 * HP:1 * HP]          # layer-0 pre-activation  (mu | logvar)
    a1 = xw[:, 1 * HP:2 * HP]          # layer-1 x_s-side term   (mu | logvar)
    ae = xw[:, 2 * HP:3 * HP]          # enc     x_s-side term   (mu | logvar)

    h0 = jax.nn.relu(a0)
    h1 = jax.nn.relu(a1 + jnp.dot(h0.astype(xs.dtype), w1b_ref[...],
                                  preferred_element_type=jnp.float32))
    out = ae + jnp.dot(h1.astype(xs.dtype), web_ref[...],
                       preferred_element_type=jnp.float32)

    # Columns [L:2L] carry log_var: Hardtanh(-6, 2) then std = exp(0.5 * lv).
    col = jax.lax.broadcasted_iota(jnp.int32, out.shape, 1)
    is_lv = (col >= latent_dims) & (col < 2 * latent_dims)
    std = jnp.exp(0.5 * jnp.clip(out, -6.0, 2.0))
    o_ref[...] = jnp.where(is_lv, std, out)


# ---------------------------------------------------------------------------
# Weight packing: fuse branches, fold biases, pad to lane-dense shapes.
# ---------------------------------------------------------------------------

def pack_params(params, h, S, latent_dims, dtype=jnp.bfloat16):
    """Build the fused/padded kernel weights from torch-layout Linear params."""
    L = latent_dims
    D = h + S
    assert 2 * L <= HP, "latent_dims too large for a single 128-lane slab"
    D_pad = _round_up(D + 1, 128)   # +1 row for the folded bias ("ones" column)

    def wt(name):
        w, b = params[name]          # torch layout: w (out, in), b (out,)
        return np.asarray(w, np.float32).T, np.asarray(b, np.float32)

    w_mu0, b_mu0 = wt("mu_0")
    w_mu1, b_mu1 = wt("mu_1")
    w_mue, b_mue = wt("mu_enc")
    w_lv0, b_lv0 = wt("log_var_0")
    w_lv1, b_lv1 = wt("log_var_1")
    w_lve, b_lve = wt("log_var_enc")

    def fuse_xs_side(wa_mu, b_mu, wa_lv, b_lv):
        # x_s-side weight (+ bias folded into row D) -> (D_pad, HP)
        w = np.zeros((D_pad, HP), np.float32)
        w[:D, 0:L] = wa_mu[:D]
        w[:D, L:2 * L] = wa_lv[:D]
        w[D, 0:L] = b_mu
        w[D, L:2 * L] = b_lv
        return w

    def fuse_hidden_side(wb_mu, wb_lv):
        # hidden-side weight -> block-diagonal (HP, HP)
        w = np.zeros((HP, HP), np.float32)
        w[0:L, 0:L] = wb_mu
        w[L:2 * L, L:2 * L] = wb_lv
        return w

    wxs = np.concatenate([
        fuse_xs_side(w_mu0, b_mu0, w_lv0, b_lv0),           # layer 0
        fuse_xs_side(w_mu1, b_mu1, w_lv1, b_lv1),           # layer 1 (x_s part)
        fuse_xs_side(w_mue, b_mue, w_lve, b_lve),           # enc     (x_s part)
    ], axis=1)                                              # (D_pad, 3*HP)
    w1b = fuse_hidden_side(w_mu1[D:D + L], w_lv1[D:D + L])  # (HP, HP)
    web = fuse_hidden_side(w_mue[D:D + L], w_lve[D:D + L])  # (HP, HP)

    return {
        "wxs": jnp.asarray(wxs, dtype),
        "w1b": jnp.asarray(w1b, dtype),
        "web": jnp.asarray(web, dtype),
        "D": D, "D_pad": D_pad, "L": L,
    }


# ---------------------------------------------------------------------------
# Wrapper around pallas_call (row-tiled grid, parallel across TensorCores).
# ---------------------------------------------------------------------------

def gated_conv2d_residual_encoder(x_s, packed, *, tile_m=256):
    wxs, w1b, web = packed["wxs"], packed["w1b"], packed["web"]
    D, D_pad, L = packed["D"], packed["D_pad"], packed["L"]
    dtype = wxs.dtype

    N = x_s.shape[0]
    assert tile_m % 16 == 0
    tm = min(tile_m, _round_up(N, 16))          # multiple of 16 (bf16 sublanes)
    n_pad = _round_up(N, tm)

    # Pad rows, lane-pad features, and append the bias "ones" column at col D.
    xs_pad = jnp.zeros((n_pad, D_pad), dtype)
    xs_pad = xs_pad.at[:N, :D].set(x_s.astype(dtype))
    xs_pad = xs_pad.at[:N, D].set(1.0)

    kernel = functools.partial(_residual_encoder_kernel, latent_dims=L)
    out = pl.pallas_call(
        kernel,
        out_shape=jax.ShapeDtypeStruct((n_pad, HP), jnp.float32),
        grid=(n_pad // tm,),
        in_specs=[
            pl.BlockSpec((tm, D_pad), lambda i: (i, 0)),       # row tile
            pl.BlockSpec((D_pad, 3 * HP), lambda i: (0, 0)),   # resident weights
            pl.BlockSpec((HP, HP), lambda i: (0, 0)),
            pl.BlockSpec((HP, HP), lambda i: (0, 0)),
        ],
        out_specs=pl.BlockSpec((tm, HP), lambda i: (i, 0)),    # lane-dense output
        compiler_params=pltpu.CompilerParams(
            dimension_semantics=("parallel",),
            vmem_limit_bytes=64 * 1024 * 1024,
        ),
    )(xs_pad, wxs, w1b, web)

    mu = out[:N, 0:L]
    std = out[:N, L:2 * L]
    return mu, std


# ---------------------------------------------------------------------------
# Deterministic torch-like parameter init + pure-JAX reference (f32, unfused).
# ---------------------------------------------------------------------------

def init_params(key, h, S, latent_dims):
    """nn.Linear-layout params: weight (out_features, in_features), bias (out,)."""
    D, L = h + S, latent_dims
    names_shapes = [
        ("mu_0", (L, D)), ("mu_1", (L, D + L)), ("mu_enc", (L, D + L)),
        ("log_var_0", (L, D)), ("log_var_1", (L, D + L)), ("log_var_enc", (L, D + L)),
    ]
    params = {}
    keys = jax.random.split(key, 2 * len(names_shapes))
    for i, (name, (fo, fi)) in enumerate(names_shapes):
        bound = 1.0 / np.sqrt(fi)
        w = jax.random.uniform(keys[2 * i], (fo, fi), jnp.float32, -bound, bound)
        b = jax.random.uniform(keys[2 * i + 1], (fo,), jnp.float32, -bound, bound)
        params[name] = (w, b)
    return params


def reference_forward(params, x_s):
    """Direct transcription of GatedConv2dResidualEncoder.forward (f32)."""
    def lin(name, x):
        w, b = params[name]
        return x @ w.T + b

    x_mu = jax.nn.relu(lin("mu_0", x_s))
    x_mu = jax.nn.relu(lin("mu_1", jnp.concatenate([x_s, x_mu], axis=-1)))
    mu = lin("mu_enc", jnp.concatenate([x_s, x_mu], axis=-1))

    x_lv = jax.nn.relu(lin("log_var_0", x_s))
    x_lv = jax.nn.relu(lin("log_var_1", jnp.concatenate([x_s, x_lv], axis=-1)))
    lv = jnp.clip(lin("log_var_enc", jnp.concatenate([x_s, x_lv], axis=-1)),
                  -6.0, 2.0)
    return mu, jnp.exp(0.5 * lv)


# ---------------------------------------------------------------------------

if __name__ == "__main__":
    key = jax.random.PRNGKey(0)
    kp, kx = jax.random.split(key)

    # Module default h=294 (6*7*7 flattened conv map); small S / latent / batch.
    h, S, latent_dims = 294, 2, 8
    batch = 16
    D = h + S

    params = init_params(kp, h, S, latent_dims)
    x_s = jax.random.normal(kx, (batch, D), jnp.float32)

    packed = pack_params(params, h, S, latent_dims, dtype=jnp.bfloat16)
    mu, std = gated_conv2d_residual_encoder(x_s, packed)
    jax.block_until_ready((mu, std))

    mu_ref, std_ref = reference_forward(params, x_s)

    assert mu.shape == (batch, latent_dims), mu.shape
    assert std.shape == (batch, latent_dims), std.shape
    assert bool(jnp.all(jnp.isfinite(mu))) and bool(jnp.all(std > 0))
    # bf16 MXU inputs -> loose tolerance vs the f32 unfused reference.
    assert bool(jnp.allclose(mu, mu_ref, atol=5e-2, rtol=5e-2)), \
        float(jnp.max(jnp.abs(mu - mu_ref)))
    assert bool(jnp.allclose(std, std_ref, atol=5e-2, rtol=5e-2)), \
        float(jnp.max(jnp.abs(std - std_ref)))
    print("KERNEL_OK")
</pallas_src>

<mosaic_0001>
module attributes {stable_mosaic.version = 11 : i64} {
  func.func @_residual_encoder_kernel(%arg0: i32, %arg1: memref<16x384xbf16, #tpu.memory_space<vmem>>, %arg2: memref<384x384xbf16, #tpu.memory_space<vmem>>, %arg3: memref<128x128xbf16, #tpu.memory_space<vmem>>, %arg4: memref<128x128xbf16, #tpu.memory_space<vmem>>, %arg5: memref<16x128xf32, #tpu.memory_space<vmem>>) attributes {dimension_semantics = [#tpu.dimension_semantics<parallel>], iteration_bounds = array<i64: 1>, scalar_prefetch = 0 : i64, scratch_operands = 0 : i64, tpu.core_type = #tpu.core_type<tc>, window_params = [{transform_indices = @transform_0, window_bounds = array<i64: 16, 384>}, {pipeline_mode = #tpu.pipeline_mode<synchronous>, transform_indices = @transform_1, window_bounds = array<i64: 384, 384>}, {pipeline_mode = #tpu.pipeline_mode<synchronous>, transform_indices = @transform_2, window_bounds = array<i64: 128, 128>}, {pipeline_mode = #tpu.pipeline_mode<synchronous>, transform_indices = @transform_3, window_bounds = array<i64: 128, 128>}, {transform_indices = @transform_4, window_bounds = array<i64: 16, 128>}]} {
    %c0 = arith.constant 0 : index
    %c0_0 = arith.constant 0 : index
    %0 = vector.load %arg1[%c0, %c0_0] : memref<16x384xbf16, #tpu.memory_space<vmem>>, vector<16x384xbf16>
    %c0_1 = arith.constant 0 : index
    %c0_2 = arith.constant 0 : index
    %1 = vector.load %arg2[%c0_1, %c0_2] : memref<384x384xbf16, #tpu.memory_space<vmem>>, vector<384x384xbf16>
    %cst = arith.constant dense<0.000000e+00> : vector<16x384xf32>
    %2 = tpu.matmul %0, %1, %cst {dimension_numbers = #tpu.dot_dimension_numbers<[1], [0], [0], [1], [0, 0, 1, 1], [], []>} : vector<16x384xbf16>, vector<384x384xbf16>, vector<16x384xf32> -> vector<16x384xf32>
    %3 = vector.extract_strided_slice %2 {offsets = [0, 0], sizes = [16, 128], strides = [1, 1]} : vector<16x384xf32> to vector<16x128xf32>
    %4 = vector.extract_strided_slice %2 {offsets = [0, 128], sizes = [16, 128], strides = [1, 1]} : vector<16x384xf32> to vector<16x128xf32>
    %5 = vector.extract_strided_slice %2 {offsets = [0, 256], sizes = [16, 128], strides = [1, 1]} : vector<16x384xf32> to vector<16x128xf32>
    %cst_3 = arith.constant 0.000000e+00 : f32
    %6 = vector.broadcast %cst_3 : f32 to vector<16x128xf32>
    %7 = arith.maximumf %3, %6 : vector<16x128xf32>
    %8 = arith.truncf %7 : vector<16x128xf32> to vector<16x128xbf16>
    %c0_4 = arith.constant 0 : index
    %c0_5 = arith.constant 0 : index
    %9 = vector.load %arg3[%c0_4, %c0_5] : memref<128x128xbf16, #tpu.memory_space<vmem>>, vector<128x128xbf16>
    %cst_6 = arith.constant dense<0.000000e+00> : vector<16x128xf32>
    %10 = tpu.matmul %8, %9, %cst_6 {dimension_numbers = #tpu.dot_dimension_numbers<[1], [0], [0], [1], [0, 0, 1, 1], [], []>} : vector<16x128xbf16>, vector<128x128xbf16>, vector<16x128xf32> -> vector<16x128xf32>
    %11 = arith.addf %4, %10 : vector<16x128xf32>
    %cst_7 = arith.constant 0.000000e+00 : f32
    %12 = vector.broadcast %cst_7 : f32 to vector<16x128xf32>
    %13 = arith.maximumf %11, %12 : vector<16x128xf32>
    %14 = arith.truncf %13 : vector<16x128xf32> to vector<16x128xbf16>
    %c0_8 = arith.constant 0 : index
    %c0_9 = arith.constant 0 : index
    %15 = vector.load %arg4[%c0_8, %c0_9] : memref<128x128xbf16, #tpu.memory_space<vmem>>, vector<128x128xbf16>
    %cst_10 = arith.constant dense<0.000000e+00> : vector<16x128xf32>
    %16 = tpu.matmul %14, %15, %cst_10 {dimension_numbers = #tpu.dot_dimension_numbers<[1], [0], [0], [1], [0, 0, 1, 1], [], []>} : vector<16x128xbf16>, vector<128x128xbf16>, vector<16x128xf32> -> vector<16x128xf32>
    %17 = arith.addf %5, %16 : vector<16x128xf32>
    %18 = tpu.iota {dimensions = array<i32: 1>} : vector<16x128xi32>
    %c8_i32 = arith.constant 8 : i32
    %19 = vector.broadcast %c8_i32 : i32 to vector<16x128xi32>
    %20 = arith.cmpi sge, %18, %19 : vector<16x128xi32>
    %c16_i32 = arith.constant 16 : i32
    %21 = vector.broadcast %c16_i32 : i32 to vector<16x128xi32>
    %22 = arith.cmpi slt, %18, %21 : vector<16x128xi32>
    %23 = arith.andi %20, %22 : vector<16x128xi1>
    %cst_11 = arith.constant -6.000000e+00 : f32
    %cst_12 = arith.constant 2.000000e+00 : f32
    %24 = vector.broadcast %cst_11 : f32 to vector<16x128xf32>
    %25 = arith.maximumf %24, %17 : vector<16x128xf32>
    %26 = vector.broadcast %cst_12 : f32 to vector<16x128xf32>
    %27 = arith.minimumf %26, %25 : vector<16x128xf32>
    %cst_13 = arith.constant 5.000000e-01 : f32
    %28 = vector.broadcast %cst_13 : f32 to vector<16x128xf32>
    %29 = arith.mulf %28, %27 : vector<16x128xf32>
    %30 = math.exp %29 : vector<16x128xf32>
    %31 = arith.select %23, %30, %17 : vector<16x128xi1>, vector<16x128xf32>
    %c0_14 = arith.constant 0 : index
    %c0_15 = arith.constant 0 : index
    %32 = vector.load %arg5[%c0_14, %c0_15] : memref<16x128xf32, #tpu.memory_space<vmem>>, vector<16x128xf32>
    tpu.vector_store %arg5[%c0_14, %c0_15], %31 {strides = array<i32>} : memref<16x128xf32, #tpu.memory_space<vmem>>, vector<16x128xf32>,
    return
  }
  func.func @transform_0(%arg0: i32) -> (i32, i32) {
    %c0_i32 = arith.constant 0 : i32
    %c0_i32_0 = arith.constant 0 : i32
    return %arg0, %c0_i32 : i32, i32
  }
  func.func @transform_1(%arg0: i32) -> (i32, i32) {
    %c0_i32 = arith.constant 0 : i32
    %c0_i32_0 = arith.constant 0 : i32
    %c0_i32_1 = arith.constant 0 : i32
    return %c0_i32, %c0_i32_0 : i32, i32
  }
  func.func @transform_2(%arg0: i32) -> (i32, i32) {
    %c0_i32 = arith.constant 0 : i32
    %c0_i32_0 = arith.constant 0 : i32
    %c0_i32_1 = arith.constant 0 : i32
    return %c0_i32, %c0_i32_0 : i32, i32
  }
  func.func @transform_3(%arg0: i32) -> (i32, i32) {
    %c0_i32 = arith.constant 0 : i32
    %c0_i32_0 = arith.constant 0 : i32
    %c0_i32_1 = arith.constant 0 : i32
    return %c0_i32, %c0_i32_0 : i32, i32
  }
  func.func @transform_4(%arg0: i32) -> (i32, i32) {
    %c0_i32 = arith.constant 0 : i32
    %c0_i32_0 = arith.constant 0 : i32
    return %arg0, %c0_i32 : i32, i32
  }
}

</mosaic_0001>

<llo_original>
// kernel: tpu_custom_call.1
$region0: #{tpu_custom_call.1}
  #allocation0 [shape = 'u32[]', space=smem, size = 0x4, offset = 0x4, fixed_abs, tag = 'smem constant byte address 0x4 - core index']
  #allocation1 [shape = 'u32[144,128]{1,0:T(1,128)}', space=vmem, size = 0x12000, scoped, tag = 'internal scratch']
  %s0 = inlined_call_operand.hbm [shape: bf16[16,384], index: 0, kind: input, shape index: {}]
  %s1 = inlined_call_operand.hbm [shape: bf16[384,384], index: 1, kind: input, shape index: {}]
  %s2 = inlined_call_operand.hbm [shape: bf16[128,128], index: 2, kind: input, shape index: {}]
  %s3 = inlined_call_operand.hbm [shape: bf16[128,128], index: 3, kind: input, shape index: {}]
  %s4 = inlined_call_operand.hbm [shape: f32[16,128], index: 4, kind: output, shape index: {}]
  %s5 = sld [smem:[#allocation0]]
  $region42: #{tpu_custom_call.1} parent=0
    _
  %s7 = ssub.s32 1, %s5
  %s8 = scalar_select 0, %s7, %s5
  $region1: #{tpu_custom_call.1} parent=0
    #allocation2 [shape = 'u8[12288]{0}', space=vmem, size = 0x3000, scoped, tag = 'input window, operand 0, single buffered']
    #allocation3 [shape = 's32[1]{0}', space=sflag, size = 0x4, scoped, tag = 'scoped memory for tpu_custom_call.1']
    #allocation4 [shape = 's32[1]{0}', space=sflag, size = 0x4, scoped, tag = 'scoped memory for tpu_custom_call.1']
    #allocation5 [shape = 'u8[294912]{0}', space=vmem, size = 0x48000, scoped, tag = 'input window, operand 1, single buffered']
    #allocation6 [shape = 's32[1]{0}', space=sflag, size = 0x4, scoped, tag = 'scoped memory for tpu_custom_call.1']
    #allocation7 [shape = 'u8[32768]{0}', space=vmem, size = 0x8000, scoped, tag = 'input window, operand 2, single buffered']
    #allocation8 [shape = 'u8[32768]{0}', space=vmem, size = 0x8000, scoped, tag = 'input window, operand 3, single buffered']
    #allocation9 [shape = 's32[1]{0}', space=sflag, size = 0x4, scoped, tag = 'scoped memory for tpu_custom_call.1']
    #allocation10 [shape = 'u8[8192]{0}', space=vmem, size = 0x2000, scoped, tag = 'output window, operand 0, single buffered']
    %9 = vsyncpa [#allocation3], 0
    %10 = vsyncpa [#allocation6], 0
    %11 = vsyncpa [#allocation9], 0
    %12 = vsyncpa [#allocation4], 0
    // Predicated region
    $region2: #{tpu_custom_call.1} parent=1 // pred_check
      _
    $region3: #{tpu_custom_call.1} parent=1 // pred_check_branch
      %14 = sbr.rel (0) target = $region5
    $region4: #{tpu_custom_call.1} parent=1 // pred_region
      %s16 = ssub.s32 384, 384
      %17 = vsyncadd [#allocation3], %s16
      %s18 = sshll.u32 [#allocation2], 4
      %s19 = int_to_ptr.vmem [resolvable:$true] %s18
      %24 = dma.hbm_to_vmem [thread:$0]  %s0, 384, %s19, [#allocation3], 192, 192, 12
    $region5: #{tpu_custom_call.1} parent=1 // pred_fallthru
      _
    // Predicated region
    $region6: #{tpu_custom_call.1} parent=1 // pred_check
      _
    $region7: #{tpu_custom_call.1} parent=1 // pred_check_branch
      %26 = sbr.rel (0) target = $region9
    $region8: #{tpu_custom_call.1} parent=1 // pred_region
      %s28 = ssub.s32 9216, 9216
      %29 = vsyncadd [#allocation6], %s28
      %s30 = sshll.u32 [#allocation5], 4
      %s31 = int_to_ptr.vmem [resolvable:$true] %s30
      %36 = dma.hbm_to_vmem [thread:$0]  %s1, 9216, %s31, [#allocation6], 192, 192, 12
    $region9: #{tpu_custom_call.1} parent=1 // pred_fallthru
      _
    // Predicated region
    $region10: #{tpu_custom_call.1} parent=1 // pred_check
      _
    $region11: #{tpu_custom_call.1} parent=1 // pred_check_branch
      %38 = sbr.rel (0) target = $region13
    $region12: #{tpu_custom_call.1} parent=1 // pred_region
      %s40 = ssub.s32 1024, 1024
      %41 = vsyncadd [#allocation6], %s40
      %s42 = sshll.u32 [#allocation7], 4
      %s43 = int_to_ptr.vmem [resolvable:$true] %s42
      %48 = dma.hbm_to_vmem [thread:$0]  %s2, 1024, %s43, [#allocation6], 64, 64, 4
    $region13: #{tpu_custom_call.1} parent=1 // pred_fallthru
      _
    // Predicated region
    $region14: #{tpu_custom_call.1} parent=1 // pred_check
      _
    $region15: #{tpu_custom_call.1} parent=1 // pred_check_branch
      %50 = sbr.rel (0) target = $region17
    $region16: #{tpu_custom_call.1} parent=1 // pred_region
      %s52 = ssub.s32 1024, 1024
      %53 = vsyncadd [#allocation9], %s52
      %s54 = sshll.u32 [#allocation8], 4
      %s55 = int_to_ptr.vmem [resolvable:$true] %s54
      %60 = dma.hbm_to_vmem [thread:$0]  %s3, 1024, %s55, [#allocation9], 64, 64, 4
    $region17: #{tpu_custom_call.1} parent=1 // pred_fallthru
      _
    // Predicated region
    $region18: #{tpu_custom_call.1} parent=1 // pred_check
      _
    $region19: #{tpu_custom_call.1} parent=1 // pred_check_branch
      %62 = sbr.rel (0) target = $region21
    $region20: #{tpu_custom_call.1} parent=1 // pred_region
      %63 = dma.done [#allocation3], 384
    $region21: #{tpu_custom_call.1} parent=1 // pred_fallthru
      _
    // Predicated region
    $region22: #{tpu_custom_call.1} parent=1 // pred_check
      _
    $region23: #{tpu_custom_call.1} parent=1 // pred_check_branch
      %65 = sbr.rel (0) target = $region25
    $region24: #{tpu_custom_call.1} parent=1 // pred_region
      %66 = dma.done [#allocation6], 9216
    $region25: #{tpu_custom_call.1} parent=1 // pred_fallthru
      _
    // Predicated region
    $region26: #{tpu_custom_call.1} parent=1 // pred_check
      _
    $region27: #{tpu_custom_call.1} parent=1 // pred_check_branch
      %68 = sbr.rel (0) target = $region29
    $region28: #{tpu_custom_call.1} parent=1 // pred_region
      %69 = dma.done [#allocation6], 1024
    $region29: #{tpu_custom_call.1} parent=1 // pred_fallthru
      _
    // Predicated region
    $region30: #{tpu_custom_call.1} parent=1 // pred_check
      _
    $region31: #{tpu_custom_call.1} parent=1 // pred_check_branch
      %71 = sbr.rel (0) target = $region33
    $region32: #{tpu_custom_call.1} parent=1 // pred_region
      %72 = dma.done [#allocation9], 1024
    $region33: #{tpu_custom_call.1} parent=1 // pred_fallthru
      _
    %v74 = vld [vmem:[#allocation2] sm:$0xff]
    %v75 = vld [vmem:[#allocation2 + $0x8] sm:$0xf]
    %v76 = vld [vmem:[#allocation2 + $0xc] sm:$0xff]
    %v77 = vld [vmem:[#allocation2 + $0x14] sm:$0xf]
    %v78 = vld [vmem:[#allocation5] sm:$0xff]
    %v79 = vld [vmem:[#allocation5 + $0x8] sm:$0xf]
    %v80 = vld [vmem:[#allocation5 + $0xc] sm:$0xff]
    %v81 = vld [vmem:[#allocation5 + $0x14] sm:$0xf]
    %v82 = vld [vmem:[#allocation5 + $0x18] sm:$0xff]
    %v83 = vld [vmem:[#allocation5 + $0x20] sm:$0xf]
    %v84 = vld [vmem:[#allocation5 + $0x24] sm:$0xff]
    %v85 = vld [vmem:[#allocation5 + $0x2c] sm:$0xf]
    %v86 = vld [vmem:[#allocation5 + $0x30] sm:$0xff]
    %v87 = vld [vmem:[#allocation5 + $0x38] sm:$0xf]
    %v88 = vld [vmem:[#allocation5 + $0x3c] sm:$0xff]
    %v89 = vld [vmem:[#allocation5 + $0x44] sm:$0xf]
    %v90 = vld [vmem:[#allocation5 + $0x48] sm:$0xff]
    %v91 = vld [vmem:[#allocation5 + $0x50] sm:$0xf]
    %v92 = vld [vmem:[#allocation5 + $0x54] sm:$0xff]
    %v93 = vld [vmem:[#allocation5 + $0x5c] sm:$0xf]
    %v94 = vld [vmem:[#allocation5 + $0x60] sm:$0xff]
    %v95 = vld [vmem:[#allocation5 + $0x68] sm:$0xf]
    %v96 = vld [vmem:[#allocation5 + $0x6c] sm:$0xff]
    %v97 = vld [vmem:[#allocation5 + $0x74] sm:$0xf]
    %v98 = vld [vmem:[#allocation5 + $0x78] sm:$0xff]
    %v99 = vld [vmem:[#allocation5 + $0x80] sm:$0xf]
    %v100 = vld [vmem:[#allocation5 + $0x84] sm:$0xff]
    %v101 = vld [vmem:[#allocation5 + $0x8c] sm:$0xf]
    %v102 = vld [vmem:[#allocation5 + $0x90] sm:$0xff]
    %v103 = vld [vmem:[#allocation5 + $0x98] sm:$0xf]
    %v104 = vld [vmem:[#allocation5 + $0x9c] sm:$0xff]
    %v105 = vld [vmem:[#allocation5 + $0xa4] sm:$0xf]
    %v106 = vld [vmem:[#allocation5 + $0xa8] sm:$0xff]
    %v107 = vld [vmem:[#allocation5 + $0xb0] sm:$0xf]
    %v108 = vld [vmem:[#allocation5 + $0xb4] sm:$0xff]
    %v109 = vld [vmem:[#allocation5 + $0xbc] sm:$0xf]
    %v110 = vld [vmem:[#allocation5 + $0xc0] sm:$0xff]
    %v111 = vld [vmem:[#allocation5 + $0xc8] sm:$0xf]
    %v112 = vld [vmem:[#allocation5 + $0xcc] sm:$0xff]
    %v113 = vld [vmem:[#allocation5 + $0xd4] sm:$0xf]
    %v114 = vld [vmem:[#allocation5 + $0xd8] sm:$0xff]
    %v115 = vld [vmem:[#allocation5 + $0xe0] sm:$0xf]
    %v116 = vld [vmem:[#allocation5 + $0xe4] sm:$0xff]
    %v117 = vld [vmem:[#allocation5 + $0xec] sm:$0xf]
    %v118 = vld [vmem:[#allocation5 + $0xf0] sm:$0xff]
    %v119 = vld [vmem:[#allocation5 + $0xf8] sm:$0xf]
    %v120 = vld [vmem:[#allocation5 + $0xfc] sm:$0xff]
    %v121 = vld [vmem:[#allocation5 + $0x104] sm:$0xf]
    %v122 = vld [vmem:[#allocation5 + $0x108] sm:$0xff]
    %v123 = vld [vmem:[#allocation5 + $0x110] sm:$0xf]
    %v124 = vld [vmem:[#allocation5 + $0x114] sm:$0xff]
    %v125 = vld [vmem:[#allocation5 + $0x11c] sm:$0xf]
    %v126 = vld [vmem:[#allocation5 + $0x120] sm:$0xff]
    %v127 = vld [vmem:[#allocation5 + $0x128] sm:$0xf]
    %v128 = vld [vmem:[#allocation5 + $0x12c] sm:$0xff]
    %v129 = vld [vmem:[#allocation5 + $0x134] sm:$0xf]
    %v130 = vld [vmem:[#allocation5 + $0x138] sm:$0xff]
    %v131 = vld [vmem:[#allocation5 + $0x140] sm:$0xf]
    %v132 = vld [vmem:[#allocation5 + $0x144] sm:$0xff]
    %v133 = vld [vmem:[#allocation5 + $0x14c] sm:$0xf]
    %v134 = vld [vmem:[#allocation5 + $0x150] sm:$0xff]
    %v135 = vld [vmem:[#allocation5 + $0x158] sm:$0xf]
    %v136 = vld [vmem:[#allocation5 + $0x15c] sm:$0xff]
    %v137 = vld [vmem:[#allocation5 + $0x164] sm:$0xf]
    %v138 = vld [vmem:[#allocation5 + $0x168] sm:$0xff]
    %v139 = vld [vmem:[#allocation5 + $0x170] sm:$0xf]
    %v140 = vld [vmem:[#allocation5 + $0x174] sm:$0xff]
    %v141 = vld [vmem:[#allocation5 + $0x17c] sm:$0xf]
    %v142 = vld [vmem:[#allocation5 + $0x180] sm:$0xff]
    %v143 = vld [vmem:[#allocation5 + $0x188] sm:$0xf]
    %v144 = vld [vmem:[#allocation5 + $0x18c] sm:$0xff]
    %v145 = vld [vmem:[#allocation5 + $0x194] sm:$0xf]
    %v146 = vld [vmem:[#allocation5 + $0x198] sm:$0xff]
    %v147 = vld [vmem:[#allocation5 + $0x1a0] sm:$0xf]
    %v148 = vld [vmem:[#allocation5 + $0x1a4] sm:$0xff]
    %v149 = vld [vmem:[#allocation5 + $0x1ac] sm:$0xf]
    %v150 = vld [vmem:[#allocation5 + $0x1b0] sm:$0xff]
    %v151 = vld [vmem:[#allocation5 + $0x1b8] sm:$0xf]
    %v152 = vld [vmem:[#allocation5 + $0x1bc] sm:$0xff]
    %v153 = vld [vmem:[#allocation5 + $0x1c4] sm:$0xf]
    %v154 = vld [vmem:[#allocation5 + $0x1c8] sm:$0xff]
    %v155 = vld [vmem:[#allocation5 + $0x1d0] sm:$0xf]
    %v156 = vld [vmem:[#allocation5 + $0x1d4] sm:$0xff]
    %v157 = vld [vmem:[#allocation5 + $0x1dc] sm:$0xf]
    %v158 = vld [vmem:[#allocation5 + $0x1e0] sm:$0xff]
    %v159 = vld [vmem:[#allocation5 + $0x1e8] sm:$0xf]
    %v160 = vld [vmem:[#allocation5 + $0x1ec] sm:$0xff]
    %v161 = vld [vmem:[#allocation5 + $0x1f4] sm:$0xf]
    %v162 = vld [vmem:[#allocation5 + $0x1f8] sm:$0xff]
    %v163 = vld [vmem:[#allocation5 + $0x200] sm:$0xf]
    %v164 = vld [vmem:[#allocation5 + $0x204] sm:$0xff]
    %v165 = vld [vmem:[#allocation5 + $0x20c] sm:$0xf]
    %v166 = vld [vmem:[#allocation5 + $0x210] sm:$0xff]
    %v167 = vld [vmem:[#allocation5 + $0x218] sm:$0xf]
    %v168 = vld [vmem:[#allocation5 + $0x21c] sm:$0xff]
    %v169 = vld [vmem:[#allocation5 + $0x224] sm:$0xf]
    %v170 = vld [vmem:[#allocation5 + $0x228] sm:$0xff]
    %v171 = vld [vmem:[#allocation5 + $0x230] sm:$0xf]
    %v172 = vld [vmem:[#allocation5 + $0x234] sm:$0xff]
    %v173 = vld [vmem:[#allocation5 + $0x23c] sm:$0xf]
    %v178 = vunpack.c.l.b16 %v74
    %v179 = vunpack.c.h.b16 %v74
    %v180 = vunpack.c.l.b16 %v75
    %v181 = vunpack.c.l.b16 %v76
    %v182 = vunpack.c.h.b16 %v76
    %v183 = vunpack.c.l.b16 %v77
    %v184 = vpack.c.b16 %v181, %v178
    %v185 = vpack.c.b16 %v182, %v179
    %v186 = vpack.c.b16 %v183, %v180
    %v286 = vunpack.c.l.b16 %v78
    %v287 = vunpack.c.h.b16 %v78
    %v288 = vunpack.c.l.b16 %v79
    %v289 = vunpack.c.l.b16 %v80
    %v290 = vunpack.c.h.b16 %v80
    %v291 = vunpack.c.l.b16 %v81
    %v292 = vunpack.c.l.b16 %v82
    %v293 = vunpack.c.h.b16 %v82
    %v294 = vunpack.c.l.b16 %v83
    %v295 = vunpack.c.l.b16 %v84
    %v296 = vunpack.c.h.b16 %v84
    %v297 = vunpack.c.l.b16 %v85
    %v298 = vunpack.c.l.b16 %v86
    %v299 = vunpack.c.h.b16 %v86
    %v300 = vunpack.c.l.b16 %v87
    %v301 = vunpack.c.l.b16 %v88
    %v302 = vunpack.c.h.b16 %v88
    %v303 = vunpack.c.l.b16 %v89
    %v304 = vunpack.c.l.b16 %v90
    %v305 = vunpack.c.h.b16 %v90
    %v306 = vunpack.c.l.b16 %v91
    %v307 = vunpack.c.l.b16 %v92
    %v308 = vunpack.c.h.b16 %v92
    %v309 = vunpack.c.l.b16 %v93
    %v310 = vunpack.c.l.b16 %v94
    %v311 = vunpack.c.h.b16 %v94
    %v312 = vunpack.c.l.b16 %v95
    %v313 = vunpack.c.l.b16 %v96
    %v314 = vunpack.c.h.b16 %v96
    %v315 = vunpack.c.l.b16 %v97
    %v316 = vunpack.c.l.b16 %v98
    %v317 = vunpack.c.h.b16 %v98
    %v318 = vunpack.c.l.b16 %v99
    %v319 = vunpack.c.l.b16 %v100
    %v320 = vunpack.c.h.b16 %v100
    %v321 = vunpack.c.l.b16 %v101
    %v322 = vunpack.c.l.b16 %v102
    %v323 = vunpack.c.h.b16 %v102
    %v324 = vunpack.c.l.b16 %v103
    %v325 = vunpack.c.l.b16 %v104
    %v326 = vunpack.c.h.b16 %v104
    %v327 = vunpack.c.l.b16 %v105
    %v328 = vunpack.c.l.b16 %v106
    %v329 = vunpack.c.h.b16 %v106
    %v330 = vunpack.c.l.b16 %v107
    %v331 = vunpack.c.l.b16 %v108
    %v332 = vunpack.c.h.b16 %v108
    %v333 = vunpack.c.l.b16 %v109
    %v334 = vunpack.c.l.b16 %v110
    %v335 = vunpack.c.h.b16 %v110
    %v336 = vunpack.c.l.b16 %v111
    %v337 = vunpack.c.l.b16 %v112
    %v338 = vunpack.c.h.b16 %v112
    %v339 = vunpack.c.l.b16 %v113
    %v340 = vunpack.c.l.b16 %v114
    %v341 = vunpack.c.h.b16 %v114
    %v342 = vunpack.c.l.b16 %v115
    %v343 = vunpack.c.l.b16 %v116
    %v344 = vunpack.c.h.b16 %v116
    %v345 = vunpack.c.l.b16 %v117
    %v346 = vunpack.c.l.b16 %v118
    %v347 = vunpack.c.h.b16 %v118
    %v348 = vunpack.c.l.b16 %v119
    %v349 = vunpack.c.l.b16 %v120
    %v350 = vunpack.c.h.b16 %v120
    %v351 = vunpack.c.l.b16 %v121
    %v352 = vunpack.c.l.b16 %v122
    %v353 = vunpack.c.h.b16 %v122
    %v354 = vunpack.c.l.b16 %v123
    %v355 = vunpack.c.l.b16 %v124
    %v356 = vunpack.c.h.b16 %v124
    %v357 = vunpack.c.l.b16 %v125
    %v358 = vunpack.c.l.b16 %v126
    %v359 = vunpack.c.h.b16 %v126
    %v360 = vunpack.c.l.b16 %v127
    %v361 = vunpack.c.l.b16 %v128
    %v362 = vunpack.c.h.b16 %v128
    %v363 = vunpack.c.l.b16 %v129
    %v364 = vunpack.c.l.b16 %v130
    %v365 = vunpack.c.h.b16 %v130
    %v366 = vunpack.c.l.b16 %v131
    %v367 = vunpack.c.l.b16 %v132
    %v368 = vunpack.c.h.b16 %v132
    %v369 = vunpack.c.l.b16 %v133
    %v370 = vunpack.c.l.b16 %v134
    %v371 = vunpack.c.h.b16 %v134
    %v372 = vunpack.c.l.b16 %v135
    %v373 = vunpack.c.l.b16 %v136
    %v374 = vunpack.c.h.b16 %v136
    %v375 = vunpack.c.l.b16 %v137
    %v376 = vunpack.c.l.b16 %v138
    %v377 = vunpack.c.h.b16 %v138
    %v378 = vunpack.c.l.b16 %v139
    %v379 = vunpack.c.l.b16 %v140
    %v380 = vunpack.c.h.b16 %v140
    %v381 = vunpack.c.l.b16 %v141
    %v382 = vunpack.c.l.b16 %v142
    %v383 = vunpack.c.h.b16 %v142
    %v384 = vunpack.c.l.b16 %v143
    %v385 = vunpack.c.l.b16 %v144
    %v386 = vunpack.c.h.b16 %v144
    %v387 = vunpack.c.l.b16 %v145
    %v388 = vunpack.c.l.b16 %v146
    %v389 = vunpack.c.h.b16 %v146
    %v390 = vunpack.c.l.b16 %v147
    %v391 = vunpack.c.l.b16 %v148
    %v392 = vunpack.c.h.b16 %v148
    %v393 = vunpack.c.l.b16 %v149
    %v394 = vunpack.c.l.b16 %v150
    %v395 = vunpack.c.h.b16 %v150
    %v396 = vunpack.c.l.b16 %v151
    %v397 = vunpack.c.l.b16 %v152
    %v398 = vunpack.c.h.b16 %v152
    %v399 = vunpack.c.l.b16 %v153
    %v400 = vunpack.c.l.b16 %v154
    %v401 = vunpack.c.h.b16 %v154
    %v402 = vunpack.c.l.b16 %v155
    %v403 = vunpack.c.l.b16 %v156
    %v404 = vunpack.c.h.b16 %v156
    %v405 = vunpack.c.l.b16 %v157
    %v406 = vunpack.c.l.b16 %v158
    %v407 = vunpack.c.h.b16 %v158
    %v408 = vunpack.c.l.b16 %v159
    %v409 = vunpack.c.l.b16 %v160
    %v410 = vunpack.c.h.b16 %v160
    %v411 = vunpack.c.l.b16 %v161
    %v412 = vunpack.c.l.b16 %v162
    %v413 = vunpack.c.h.b16 %v162
    %v414 = vunpack.c.l.b16 %v163
    %v415 = vunpack.c.l.b16 %v164
    %v416 = vunpack.c.h.b16 %v164
    %v417 = vunpack.c.l.b16 %v165
    %v418 = vunpack.c.l.b16 %v166
    %v419 = vunpack.c.h.b16 %v166
    %v420 = vunpack.c.l.b16 %v167
    %v421 = vunpack.c.l.b16 %v168
    %v422 = vunpack.c.h.b16 %v168
    %v423 = vunpack.c.l.b16 %v169
    %v424 = vunpack.c.l.b16 %v170
    %v425 = vunpack.c.h.b16 %v170
    %v426 = vunpack.c.l.b16 %v171
    %v427 = vunpack.c.l.b16 %v172
    %v428 = vunpack.c.h.b16 %v172
    %v429 = vunpack.c.l.b16 %v173
    %v430 = vpack.c.b16 %v289, %v286
    %v431 = vpack.c.b16 %v290, %v287
    %v432 = vpack.c.b16 %v291, %v288
    %v433 = vpack.c.b16 %v295, %v292
    %v434 = vpack.c.b16 %v296, %v293
    %v435 = vpack.c.b16 %v297, %v294
    %v436 = vpack.c.b16 %v301, %v298
    %v437 = vpack.c.b16 %v302, %v299
    %v438 = vpack.c.b16 %v303, %v300
    %v439 = vpack.c.b16 %v307, %v304
    %v440 = vpack.c.b16 %v308, %v305
    %v441 = vpack.c.b16 %v309, %v306
    %v442 = vpack.c.b16 %v313, %v310
    %v443 = vpack.c.b16 %v314, %v311
    %v444 = vpack.c.b16 %v315, %v312
    %v445 = vpack.c.b16 %v319, %v316
    %v446 = vpack.c.b16 %v320, %v317
    %v447 = vpack.c.b16 %v321, %v318
    %v448 = vpack.c.b16 %v325, %v322
    %v449 = vpack.c.b16 %v326, %v323
    %v450 = vpack.c.b16 %v327, %v324
    %v451 = vpack.c.b16 %v331, %v328
    %v452 = vpack.c.b16 %v332, %v329
    %v453 = vpack.c.b16 %v333, %v330
    %v454 = vpack.c.b16 %v337, %v334
    %v455 = vpack.c.b16 %v338, %v335
    %v456 = vpack.c.b16 %v339, %v336
    %v457 = vpack.c.b16 %v343, %v340
    %v458 = vpack.c.b16 %v344, %v341
    %v459 = vpack.c.b16 %v345, %v342
    %v460 = vpack.c.b16 %v349, %v346
    %v461 = vpack.c.b16 %v350, %v347
    %v462 = vpack.c.b16 %v351, %v348
    %v463 = vpack.c.b16 %v355, %v352
    %v464 = vpack.c.b16 %v356, %v353
    %v465 = vpack.c.b16 %v357, %v354
    %v466 = vpack.c.b16 %v361, %v358
    %v467 = vpack.c.b16 %v362, %v359
    %v468 = vpack.c.b16 %v363, %v360
    %v469 = vpack.c.b16 %v367, %v364
    %v470 = vpack.c.b16 %v368, %v365
    %v471 = vpack.c.b16 %v369, %v366
    %v472 = vpack.c.b16 %v373, %v370
    %v473 = vpack.c.b16 %v374, %v371
    %v474 = vpack.c.b16 %v375, %v372
    %v475 = vpack.c.b16 %v379, %v376
    %v476 = vpack.c.b16 %v380, %v377
    %v477 = vpack.c.b16 %v381, %v378
    %v478 = vpack.c.b16 %v385, %v382
    %v479 = vpack.c.b16 %v386, %v383
    %v480 = vpack.c.b16 %v387, %v384
    %v481 = vpack.c.b16 %v391, %v388
    %v482 = vpack.c.b16 %v392, %v389
    %v483 = vpack.c.b16 %v393, %v390
    %v484 = vpack.c.b16 %v397, %v394
    %v485 = vpack.c.b16 %v398, %v395
    %v486 = vpack.c.b16 %v399, %v396
    %v487 = vpack.c.b16 %v403, %v400
    %v488 = vpack.c.b16 %v404, %v401
    %v489 = vpack.c.b16 %v405, %v402
    %v490 = vpack.c.b16 %v409, %v406
    %v491 = vpack.c.b16 %v410, %v407
    %v492 = vpack.c.b16 %v411, %v408
    %v493 = vpack.c.b16 %v415, %v412
    %v494 = vpack.c.b16 %v416, %v413
    %v495 = vpack.c.b16 %v417, %v414
    %v496 = vpack.c.b16 %v421, %v418
    %v497 = vpack.c.b16 %v422, %v419
    %v498 = vpack.c.b16 %v423, %v420
    %v499 = vpack.c.b16 %v427, %v424
    %v500 = vpack.c.b16 %v428, %v425
    %v501 = vpack.c.b16 %v429, %v426
    %574 = vmatprep.subr.bf16.mxu0 %v431
    %575 = vmatpush1.bf16.msra.mxu0 %v430
    %576 = vmatprep.subr.bf16.mxu0 %v434
    %577 = vmatpush1.bf16.msra.mxu0 %v433
    %578 = vmatprep.subr.bf16.mxu0 %v437
    %579 = vmatpush1.bf16.msra.mxu0 %v436
    %580 = vmatprep.subr.bf16.mxu0 %v440
    %581 = vmatpush1.bf16.msra.mxu0 %v439
    %582 = vmatprep.subr.bf16.mxu0 %v443
    %583 = vmatpush1.bf16.msra.mxu0 %v442
    %584 = vmatprep.subr.bf16.mxu0 %v446
    %585 = vmatpush1.bf16.msra.mxu0 %v445
    %586 = vmatprep.subr.bf16.mxu0 %v449
    %587 = vmatpush1.bf16.msra.mxu0 %v448
    %588 = vmatprep.subr.bf16.mxu0 %v452
    %589 = vmatpush1.bf16.msra.mxu0 %v451
    %590 = vmatprep.subr.bf16.mxu0 %v455
    %591 = vmatpush1.bf16.msra.mxu0 %v454
    %592 = vmatprep.subr.bf16.mxu0 %v458
    %593 = vmatpush1.bf16.msra.mxu0 %v457
    %594 = vmatprep.subr.bf16.mxu0 %v461
    %595 = vmatpush1.bf16.msra.mxu0 %v460
    %596 = vmatprep.subr.bf16.mxu0 %v464
    %597 = vmatpush1.bf16.msra.mxu0 %v463
    %598 = vmatprep.subr.bf16.mxu0 %v467
    %599 = vmatpush1.bf16.msra.mxu0 %v466
    %600 = vmatprep.subr.bf16.mxu0 %v470
    %601 = vmatpush1.bf16.msra.mxu0 %v469
    %602 = vmatprep.subr.bf16.mxu0 %v473
    %603 = vmatpush1.bf16.msra.mxu0 %v472
    %604 = vmatprep.subr.bf16.mxu0 %v476
    %605 = vmatpush1.bf16.msra.mxu0 %v475
    %606 = vmatprep.mubr.bf16.mxu0 %v185
    %607 = vmatmul.mubr.bf16.gmra.mrb[0].mxu0 %v184
    %v608 = vpop.f32.mrb[0].mxu0
    %v609 = vadd.f32 0.0, %v608
    %v610 = vpop.f32.mrb[0].mxu0
    %v611 = vadd.f32 0.0, %v610
    %v612 = vpop.f32.mrb[0].mxu0
    %v613 = vadd.f32 0.0, %v612
    %v614 = vpop.f32.mrb[0].mxu0
    %v615 = vadd.f32 0.0, %v614
    %616 = vdwg.mxu0
    %617 = vmatprep.subr.bf16.mxu0 %v479
    %618 = vmatpush1.bf16.msra.mxu0 %v478
    %619 = vmatprep.subr.bf16.mxu0 %v482
    %620 = vmatpush1.bf16.msra.mxu0 %v481
    %621 = vmatprep.subr.bf16.mxu0 %v485
    %622 = vmatpush1.bf16.msra.mxu0 %v484
    %623 = vmatprep.subr.bf16.mxu0 %v488
    %624 = vmatpush1.bf16.msra.mxu0 %v487
    %625 = vmatprep.subr.bf16.mxu0 %v491
    %626 = vmatpush1.bf16.msra.mxu0 %v490
    %627 = vmatprep.subr.bf16.mxu0 %v494
    %628 = vmatpush1.bf16.msra.mxu0 %v493
    %629 = vmatprep.subr.bf16.mxu0 %v497
    %630 = vmatpush1.bf16.msra.mxu0 %v496
    %631 = vmatprep.subr.bf16.mxu0 %v500
    %632 = vmatpush1.bf16.msra.mxu0 %v499
    %633 = vmatprep.subr.bf16.mxu0 0
    %634 = vmatpush1.bf16.msra.mxu0 0
    %635 = vmatprep.subr.bf16.mxu0 0
    %636 = vmatpush1.bf16.msra.mxu0 0
    %637 = vmatprep.subr.bf16.mxu0 0
    %638 = vmatpush1.bf16.msra.mxu0 0
    %639 = vmatprep.subr.bf16.mxu0 0
    %640 = vmatpush1.bf16.msra.mxu0 0
    %641 = vmatprep.subr.bf16.mxu0 0
    %642 = vmatpush1.bf16.msra.mxu0 0
    %643 = vmatprep.subr.bf16.mxu0 0
    %644 = vmatpush1.bf16.msra.mxu0 0
    %645 = vmatprep.subr.bf16.mxu0 0
    %646 = vmatpush1.bf16.msra.mxu0 0
    %647 = vmatprep.subr.bf16.mxu0 0
    %648 = vmatpush1.bf16.msra.mxu0 0
    %649 = vmatprep.mubr.bf16.mxu0 0
    %650 = vmatmul.mubr.bf16.gmra.mrb[0].mxu0 %v186
    %v651 = vpop.f32.mrb[0].mxu0
    %v652 = vadd.f32 %v609, %v651
    %v653 = vpop.f32.mrb[0].mxu0
    %v654 = vadd.f32 %v611, %v653
    %v655 = vpop.f32.mrb[0].mxu0
    %v656 = vadd.f32 %v613, %v655
    %v657 = vpop.f32.mrb[0].mxu0
    %v658 = vadd.f32 %v615, %v657
    %659 = vdwg.mxu0
    %660 = vmatprep.subr.bf16.mxu0 0
    %661 = vmatpush1.bf16.msra.mxu0 %v432
    %662 = vmatprep.subr.bf16.mxu0 0
    %663 = vmatpush1.bf16.msra.mxu0 %v435
    %664 = vmatprep.subr.bf16.mxu0 0
    %665 = vmatpush1.bf16.msra.mxu0 %v438
    %666 = vmatprep.subr.bf16.mxu0 0
    %667 = vmatpush1.bf16.msra.mxu0 %v441
    %668 = vmatprep.subr.bf16.mxu0 0
    %669 = vmatpush1.bf16.msra.mxu0 %v444
    %670 = vmatprep.subr.bf16.mxu0 0
    %671 = vmatpush1.bf16.msra.mxu0 %v447
    %672 = vmatprep.subr.bf16.mxu0 0
    %673 = vmatpush1.bf16.msra.mxu0 %v450
    %674 = vmatprep.subr.bf16.mxu0 0
    %675 = vmatpush1.bf16.msra.mxu0 %v453
    %676 = vmatprep.subr.bf16.mxu0 0
    %677 = vmatpush1.bf16.msra.mxu0 %v456
    %678 = vmatprep.subr.bf16.mxu0 0
    %679 = vmatpush1.bf16.msra.mxu0 %v459
    %680 = vmatprep.subr.bf16.mxu0 0
    %681 = vmatpush1.bf16.msra.mxu0 %v462
    %682 = vmatprep.subr.bf16.mxu0 0
    %683 = vmatpush1.bf16.msra.mxu0 %v465
    %684 = vmatprep.subr.bf16.mxu0 0
    %685 = vmatpush1.bf16.msra.mxu0 %v468
    %686 = vmatprep.subr.bf16.mxu0 0
    %687 = vmatpush1.bf16.msra.mxu0 %v471
    %688 = vmatprep.subr.bf16.mxu0 0
    %689 = vmatpush1.bf16.msra.mxu0 %v474
    %690 = vmatprep.subr.bf16.mxu0 0
    %691 = vmatpush1.bf16.msra.mxu0 %v477
    %692 = vmatprep.mubr.bf16.mxu0 %v185
    %693 = vmatmul.mubr.bf16.gmra.mrb[0].mxu0 %v184
    %v694 = vpop.f32.mrb[0].mxu0
    %v695 = vadd.f32 0.0, %v694
    %v696 = vpop.f32.mrb[0].mxu0
    %v697 = vpop.f32.mrb[0].mxu0
    %v698 = vadd.f32 0.0, %v697
    %v699 = vpop.f32.mrb[0].mxu0
    %700 = vdwg.mxu0
    %701 = vmatprep.subr.bf16.mxu0 0
    %702 = vmatpush1.bf16.msra.mxu0 %v480
    %703 = vmatprep.subr.bf16.mxu0 0
    %704 = vmatpush1.bf16.msra.mxu0 %v483
    %705 = vmatprep.subr.bf16.mxu0 0
    %706 = vmatpush1.bf16.msra.mxu0 %v486
    %707 = vmatprep.subr.bf16.mxu0 0
    %708 = vmatpush1.bf16.msra.mxu0 %v489
    %709 = vmatprep.subr.bf16.mxu0 0
    %710 = vmatpush1.bf16.msra.mxu0 %v492
    %711 = vmatprep.subr.bf16.mxu0 0
    %712 = vmatpush1.bf16.msra.mxu0 %v495
    %713 = vmatprep.subr.bf16.mxu0 0
    %714 = vmatpush1.bf16.msra.mxu0 %v498
    %715 = vmatprep.subr.bf16.mxu0 0
    %716 = vmatpush1.bf16.msra.mxu0 %v501
    %717 = vmatprep.subr.bf16.mxu0 0
    %718 = vmatpush1.bf16.msra.mxu0 0
    %719 = vmatprep.subr.bf16.mxu0 0
    %720 = vmatpush1.bf16.msra.mxu0 0
    %721 = vmatprep.subr.bf16.mxu0 0
    %722 = vmatpush1.bf16.msra.mxu0 0
    %723 = vmatprep.subr.bf16.mxu0 0
    %724 = vmatpush1.bf16.msra.mxu0 0
    %725 = vmatprep.subr.bf16.mxu0 0
    %726 = vmatpush1.bf16.msra.mxu0 0
    %727 = vmatprep.subr.bf16.mxu0 0
    %728 = vmatpush1.bf16.msra.mxu0 0
    %729 = vmatprep.subr.bf16.mxu0 0
    %730 = vmatpush1.bf16.msra.mxu0 0
    %731 = vmatprep.subr.bf16.mxu0 0
    %732 = vmatpush1.bf16.msra.mxu0 0
    %733 = vmatprep.mubr.bf16.mxu0 0
    %734 = vmatmul.mubr.bf16.gmra.mrb[0].mxu0 %v186
    %v735 = vpop.f32.mrb[0].mxu0
    %v736 = vadd.f32 %v695, %v735
    %v737 = vpop.f32.mrb[0].mxu0
    %v738 = vpop.f32.mrb[0].mxu0
    %v739 = vadd.f32 %v698, %v738
    %v740 = vpop.f32.mrb[0].mxu0
    %741 = vdwg.mxu0
    %v742 = vmax.f32 %v652, 0.0
    %v743 = vmax.f32 %v656, 0.0
    %v744 = vpack.c.bf16 %v743, %v742
    %v745 = vld [vmem:[#allocation7] sm:$0xf]
    %v746 = vld [vmem:[#allocation7 + $0x4] sm:$0xf]
    %v747 = vld [vmem:[#allocation7 + $0x8] sm:$0xf]
    %v748 = vld [vmem:[#allocation7 + $0xc] sm:$0xf]
    %v749 = vld [vmem:[#allocation7 + $0x10] sm:$0xf]
    %v750 = vld [vmem:[#allocation7 + $0x14] sm:$0xf]
    %v751 = vld [vmem:[#allocation7 + $0x18] sm:$0xf]
    %v752 = vld [vmem:[#allocation7 + $0x1c] sm:$0xf]
    %v753 = vld [vmem:[#allocation7 + $0x20] sm:$0xf]
    %v754 = vld [vmem:[#allocation7 + $0x24] sm:$0xf]
    %v755 = vld [vmem:[#allocation7 + $0x28] sm:$0xf]
    %v756 = vld [vmem:[#allocation7 + $0x2c] sm:$0xf]
    %v757 = vld [vmem:[#allocation7 + $0x30] sm:$0xf]
    %v758 = vld [vmem:[#allocation7 + $0x34] sm:$0xf]
    %v759 = vld [vmem:[#allocation7 + $0x38] sm:$0xf]
    %v760 = vld [vmem:[#allocation7 + $0x3c] sm:$0xf]
    %v777 = vunpack.c.l.b16 %v745
    %v778 = vunpack.c.l.b16 %v746
    %v779 = vunpack.c.l.b16 %v747
    %v780 = vunpack.c.l.b16 %v748
    %v781 = vunpack.c.l.b16 %v749
    %v782 = vunpack.c.l.b16 %v750
    %v783 = vunpack.c.l.b16 %v751
    %v784 = vunpack.c.l.b16 %v752
    %v785 = vunpack.c.l.b16 %v753
    %v786 = vunpack.c.l.b16 %v754
    %v787 = vunpack.c.l.b16 %v755
    %v788 = vunpack.c.l.b16 %v756
    %v789 = vunpack.c.l.b16 %v757
    %v790 = vunpack.c.l.b16 %v758
    %v791 = vunpack.c.l.b16 %v759
    %v792 = vunpack.c.l.b16 %v760
    %v793 = vpack.c.b16 %v778, %v777
    %v794 = vpack.c.b16 %v780, %v779
    %v795 = vpack.c.b16 %v782, %v781
    %v796 = vpack.c.b16 %v784, %v783
    %v797 = vpack.c.b16 %v786, %v785
    %v798 = vpack.c.b16 %v788, %v787
    %v799 = vpack.c.b16 %v790, %v789
    %v800 = vpack.c.b16 %v792, %v791
    %809 = vmatprep.subr.bf16.mxu0 0
    %810 = vmatpush1.bf16.msra.mxu0 %v793
    %811 = vmatprep.subr.bf16.mxu0 0
    %812 = vmatpush1.bf16.msra.mxu0 %v794
    %813 = vmatprep.subr.bf16.mxu0 0
    %814 = vmatpush1.bf16.msra.mxu0 %v795
    %815 = vmatprep.subr.bf16.mxu0 0
    %816 = vmatpush1.bf16.msra.mxu0 %v796
    %817 = vmatprep.subr.bf16.mxu0 0
    %818 = vmatpush1.bf16.msra.mxu0 %v797
    %819 = vmatprep.subr.bf16.mxu0 0
    %820 = vmatpush1.bf16.msra.mxu0 %v798
    %821 = vmatprep.subr.bf16.mxu0 0
    %822 = vmatpush1.bf16.msra.mxu0 %v799
    %823 = vmatprep.subr.bf16.mxu0 0
    %824 = vmatpush1.bf16.msra.mxu0 %v800
    %825 = vmatprep.subr.bf16.mxu0 0
    %826 = vmatpush1.bf16.msra.mxu0 0
    %827 = vmatprep.subr.bf16.mxu0 0
    %828 = vmatpush1.bf16.msra.mxu0 0
    %829 = vmatprep.subr.bf16.mxu0 0
    %830 = vmatpush1.bf16.msra.mxu0 0
    %831 = vmatprep.subr.bf16.mxu0 0
    %832 = vmatpush1.bf16.msra.mxu0 0
    %833 = vmatprep.subr.bf16.mxu0 0
    %834 = vmatpush1.bf16.msra.mxu0 0
    %835 = vmatprep.subr.bf16.mxu0 0
    %836 = vmatpush1.bf16.msra.mxu0 0
    %837 = vmatprep.subr.bf16.mxu0 0
    %838 = vmatpush1.bf16.msra.mxu0 0
    %839 = vmatprep.subr.bf16.mxu0 0
    %840 = vmatpush1.bf16.msra.mxu0 0
    %841 = vmatprep.mubr.bf16.mxu0 0
    %842 = vmatmul.mubr.bf16.gmra.mrb[0].mxu0 %v744
    %v843 = vpop.f32.mrb[0].mxu0
    %v844 = vadd.f32 0.0, %v843
    %v845 = vpop.f32.mrb[0].mxu0
    %v846 = vpop.f32.mrb[0].mxu0
    %v847 = vadd.f32 0.0, %v846
    %v848 = vpop.f32.mrb[0].mxu0
    %849 = vdwg.mxu0
    %v850 = vadd.f32 %v654, %v844
    %v851 = vadd.f32 %v658, %v847
    %v852 = vmax.f32 %v850, 0.0
    %v853 = vmax.f32 %v851, 0.0
    %v854 = vpack.c.bf16 %v853, %v852
    %v855 = vld [vmem:[#allocation8] sm:$0xf]
    %v856 = vld [vmem:[#allocation8 + $0x4] sm:$0xf]
    %v857 = vld [vmem:[#allocation8 + $0x8] sm:$0xf]
    %v858 = vld [vmem:[#allocation8 + $0xc] sm:$0xf]
    %v859 = vld [vmem:[#allocation8 + $0x10] sm:$0xf]
    %v860 = vld [vmem:[#allocation8 + $0x14] sm:$0xf]
    %v861 = vld [vmem:[#allocation8 + $0x18] sm:$0xf]
    %v862 = vld [vmem:[#allocation8 + $0x1c] sm:$0xf]
    %v863 = vld [vmem:[#allocation8 + $0x20] sm:$0xf]
    %v864 = vld [vmem:[#allocation8 + $0x24] sm:$0xf]
    %v865 = vld [vmem:[#allocation8 + $0x28] sm:$0xf]
    %v866 = vld [vmem:[#allocation8 + $0x2c] sm:$0xf]
    %v867 = vld [vmem:[#allocation8 + $0x30] sm:$0xf]
    %v868 = vld [vmem:[#allocation8 + $0x34] sm:$0xf]
    %v869 = vld [vmem:[#allocation8 + $0x38] sm:$0xf]
    %v870 = vld [vmem:[#allocation8 + $0x3c] sm:$0xf]
    %v887 = vunpack.c.l.b16 %v855
    %v888 = vunpack.c.l.b16 %v856
    %v889 = vunpack.c.l.b16 %v857
    %v890 = vunpack.c.l.b16 %v858
    %v891 = vunpack.c.l.b16 %v859
    %v892 = vunpack.c.l.b16 %v860
    %v893 = vunpack.c.l.b16 %v861
    %v894 = vunpack.c.l.b16 %v862
    %v895 = vunpack.c.l.b16 %v863
    %v896 = vunpack.c.l.b16 %v864
    %v897 = vunpack.c.l.b16 %v865
    %v898 = vunpack.c.l.b16 %v866
    %v899 = vunpack.c.l.b16 %v867
    %v900 = vunpack.c.l.b16 %v868
    %v901 = vunpack.c.l.b16 %v869
    %v902 = vunpack.c.l.b16 %v870
    %v903 = vpack.c.b16 %v888, %v887
    %v904 = vpack.c.b16 %v890, %v889
    %v905 = vpack.c.b16 %v892, %v891
    %v906 = vpack.c.b16 %v894, %v893
    %v907 = vpack.c.b16 %v896, %v895
    %v908 = vpack.c.b16 %v898, %v897
    %v909 = vpack.c.b16 %v900, %v899
    %v910 = vpack.c.b16 %v902, %v901
    %919 = vmatprep.subr.bf16.mxu0 0
    %920 = vmatpush1.bf16.msra.mxu0 %v903
    %921 = vmatprep.subr.bf16.mxu0 0
    %922 = vmatpush1.bf16.msra.mxu0 %v904
    %923 = vmatprep.subr.bf16.mxu0 0
    %924 = vmatpush1.bf16.msra.mxu0 %v905
    %925 = vmatprep.subr.bf16.mxu0 0
    %926 = vmatpush1.bf16.msra.mxu0 %v906
    %927 = vmatprep.subr.bf16.mxu0 0
    %928 = vmatpush1.bf16.msra.mxu0 %v907
    %929 = vmatprep.subr.bf16.mxu0 0
    %930 = vmatpush1.bf16.msra.mxu0 %v908
    %931 = vmatprep.subr.bf16.mxu0 0
    %932 = vmatpush1.bf16.msra.mxu0 %v909
    %933 = vmatprep.subr.bf16.mxu0 0
    %934 = vmatpush1.bf16.msra.mxu0 %v910
    %935 = vmatprep.subr.bf16.mxu0 0
    %936 = vmatpush1.bf16.msra.mxu0 0
    %937 = vmatprep.subr.bf16.mxu0 0
    %938 = vmatpush1.bf16.msra.mxu0 0
    %939 = vmatprep.subr.bf16.mxu0 0
    %940 = vmatpush1.bf16.msra.mxu0 0
    %941 = vmatprep.subr.bf16.mxu0 0
    %942 = vmatpush1.bf16.msra.mxu0 0
    %943 = vmatprep.subr.bf16.mxu0 0
    %944 = vmatpush1.bf16.msra.mxu0 0
    %945 = vmatprep.subr.bf16.mxu0 0
    %946 = vmatpush1.bf16.msra.mxu0 0
    %947 = vmatprep.subr.bf16.mxu0 0
    %948 = vmatpush1.bf16.msra.mxu0 0
    %949 = vmatprep.subr.bf16.mxu0 0
    %950 = vmatpush1.bf16.msra.mxu0 0
    %951 = vmatprep.mubr.bf16.mxu0 0
    %952 = vmatmul.mubr.bf16.gmra.mrb[0].mxu0 %v854
    %v953 = vpop.f32.mrb[0].mxu0
    %v954 = vadd.f32 0.0, %v953
    %v955 = vpop.f32.mrb[0].mxu0
    %v956 = vpop.f32.mrb[0].mxu0
    %v957 = vadd.f32 0.0, %v956
    %v958 = vpop.f32.mrb[0].mxu0
    %959 = vdwg.mxu0
    %v960 = vadd.f32 %v736, %v954
    %v961 = vadd.f32 %v739, %v957
    %v962 = vlaneseq
    %v963 = vand.u32 %v962, 127
    %vm964 = vcmp.ge.s32.totalorder %v963, 8
    %vm965 = vcmp.lt.s32.totalorder %v963, 16
    %vm966 = vmand %vm964, %vm965
    %v967 = vmax.f32 %v960, -6.0
    %v968 = vmax.f32 %v961, -6.0
    %v969 = vmin.f32 %v967, 2.0
    %v970 = vmin.f32 %v968, 2.0
    %v971 = vmul.f32 %v969, 0.5
    %v972 = vmul.f32 %v970, 0.5
    %v973 = vmul.f32 %v971, 1.442695
    %v974 = vpow.pop %v973
    %v975 = vmul.f32 %v972, 1.442695
    %v976 = vpow.pop %v975
    %v977 = vsel %vm966, %v974, %v960
    %v978 = vsel %vm966, %v976, %v961
    %979 = vst [vmem:[#allocation10] sm:$0xff] %v977
    %980 = vst [vmem:[#allocation10 + $0x8] sm:$0xff] %v978
    // Predicated region
    $region34: #{tpu_custom_call.1} parent=1 // pred_check
      _
    $region35: #{tpu_custom_call.1} parent=1 // pred_check_branch
      %982 = sbr.rel (0) target = $region37
    $region36: #{tpu_custom_call.1} parent=1 // pred_region
      %s984 = ssub.s32 256, 256
      %985 = vsyncadd [#allocation4], %s984
      %s986 = sshll.u32 [#allocation10], 4
      %s987 = int_to_ptr.vmem [resolvable:$true] %s986
      %992 = dma.vmem_to_hbm [thread:$0]  %s987, 256, %s4, [#allocation4], 128, 128, 8
    $region37: #{tpu_custom_call.1} parent=1 // pred_fallthru
      _
    // Predicated region
    $region38: #{tpu_custom_call.1} parent=1 // pred_check
      _
    $region39: #{tpu_custom_call.1} parent=1 // pred_check_branch
      %994 = sbr.rel (0) target = $region41
    $region40: #{tpu_custom_call.1} parent=1 // pred_region
      %995 = dma.done [#allocation4], 256
    $region41: #{tpu_custom_call.1} parent=1 // pred_fallthru
      _
    %996 = vsyncpa [#allocation3], 1
    %997 = vsyncpa [#allocation6], 1
    %998 = vsyncpa [#allocation9], 1
    %999 = vsyncpa [#allocation4], 1

</llo_original>
